<compile_context>
chip_gen: v5e
topology: v5e:2x2
jax: 0.10.0
libtpu: 0.0.40
codegen_flags: <defaults>
</compile_context>

<pallas_src>
import functools

import jax
import jax.numpy as jnp
from jax import lax
from jax.experimental import pallas as pl
from jax.experimental.pallas import tpu as pltpu

_LANES = 128


# ---------------------------------------------------------------------------
# Fused kernel: global average pool (tiled over spatial axis) + 1x1 conv + bias
# ---------------------------------------------------------------------------
def classify_kernel(x_ref, w_ref, b_ref, o_ref, acc_ref, *, inv_hw, hw, mask_tail):
    t = pl.program_id(1)
    TB, C1, T = x_ref.shape

    @pl.when(t == 0)
    def _init():
        acc_ref[...] = jnp.zeros_like(acc_ref)

    nfull = T // _LANES
    rem = T - nfull * _LANES

    if mask_tail:
        # Number of still-valid spatial positions in this tile (>= T for all
        # but the last tile).  hw, T are static; t is a cheap scalar.
        remaining = hw - t * T
        lane_idx = lax.broadcasted_iota(jnp.int32, (1, 1, _LANES), 2)

    # Lane-wide accumulation: per tile only VMEM loads + VPU adds (and a VPU
    # select when masking); no cross-lane XLU work until finalize.
    for j in range(nfull):
        lo = j * _LANES
        chunk = x_ref[:, :, lo:lo + _LANES].astype(jnp.float32)    # (TB, C1, 128)
        if mask_tail:
            chunk = jnp.where(lane_idx < (remaining - lo), chunk, 0.0)
        acc_ref[...] += chunk

    if rem:  # only reachable when T == H*W (single full-extent tile)
        lo = nfull * _LANES
        chunk = x_ref[:, :, lo:].astype(jnp.float32)               # (TB, C1, rem)
        if mask_tail:
            tail_idx = lax.broadcasted_iota(jnp.int32, (1, 1, rem), 2)
            chunk = jnp.where(tail_idx < (remaining - lo), chunk, 0.0)
        acc_ref[:, :, :rem] += chunk

    @pl.when(t == pl.num_programs(1) - 1)
    def _finalize():
        # Single cross-lane reduce + relayout, then a tiny MXU matmul.
        pooled = jnp.sum(acc_ref[...], axis=-1) * inv_hw           # (TB, C1) f32
        out = jnp.dot(pooled, w_ref[...],
                      preferred_element_type=jnp.float32)          # (TB, C2p)
        out = out + b_ref[...]
        o_ref[...] = out.reshape(o_ref.shape).astype(o_ref.dtype)


# ---------------------------------------------------------------------------
# Wrapper
# ---------------------------------------------------------------------------
def classify_forward(x, weight, bias, *, vmem_target_bytes=24 * 1024 * 1024):
    """Classify head forward.

    x      : (B, C1, H, W)  NCHW input (single tensor, any float dtype).
    weight : (C1, C2)       1x1 conv weight in matmul layout
                            (torch (C2, C1, 1, 1) -> transpose of [:, :, 0, 0]).
    bias   : (C2,)          conv bias.
    returns: (B, C2) in x.dtype
    """
    B, C1, H, W = x.shape
    C2 = weight.shape[1]
    HW = H * W

    # Keep x in its native dtype; reshape is layout-preserving (no HBM copy).
    x_r = x.reshape(B, C1, HW)
    x_item = x.dtype.itemsize
    out_dtype = x.dtype
    out_item = jnp.dtype(out_dtype).itemsize

    # Pad C2 to a lane multiple (unmasked output store, aligned MXU N dim).
    C2p = ((C2 + _LANES - 1) // _LANES) * _LANES
    w = weight.astype(jnp.float32)
    b = bias.astype(jnp.float32).reshape(1, C2)
    if C2p != C2:
        w = jnp.pad(w, ((0, 0), (0, C2p - C2)))
        b = jnp.pad(b, ((0, 0), (0, C2p - C2)))

    # Batch tile: largest power-of-two divisor of B, capped at 8.
    TB = 1
    for cand in (8, 4, 2):
        if B % cand == 0:
            TB = cand
            break

    # VMEM budget: weight/bias/output are (double-buffered) residents plus the
    # lane-wide accumulator; the remainder goes to the x double buffer.
    fixed_w = 2 * (C1 * C2p * 4 + C2p * 4)

    def x_budget(tb):
        return max(vmem_target_bytes
                   - fixed_w
                   - 2 * tb * C2p * out_item      # output buffers
                   - tb * C1 * _LANES * 4,        # accumulator scratch
                   1 << 20)

    bud = x_budget(TB)
    while TB > 1 and bud // (2 * TB * C1 * x_item) < min(HW, _LANES):
        TB //= 2
        bud = x_budget(TB)

    t_max = max(1, bud // (2 * TB * C1 * x_item))
    if t_max >= HW:
        T = HW                                    # whole spatial extent fits
    else:
        T = max(_LANES, (t_max // _LANES) * _LANES)
        if T >= HW:
            T = HW
    num_t = (HW + T - 1) // T
    mask_tail = (HW % T) != 0                     # tail tile handled in-kernel

    kern = functools.partial(classify_kernel,
                             inv_hw=1.0 / float(HW), hw=HW, mask_tail=mask_tail)

    out = pl.pallas_call(
        kern,
        out_shape=jax.ShapeDtypeStruct((B, 1, C2p), out_dtype),
        grid=(B // TB, num_t),
        in_specs=[
            pl.BlockSpec((TB, C1, T), lambda bb, tt: (bb, 0, tt)),
            pl.BlockSpec((C1, C2p), lambda bb, tt: (0, 0)),
            pl.BlockSpec((1, C2p), lambda bb, tt: (0, 0)),
        ],
        out_specs=pl.BlockSpec((TB, 1, C2p), lambda bb, tt: (bb, 0, 0)),
        scratch_shapes=[pltpu.VMEM((TB, C1, _LANES), jnp.float32)],
        compiler_params=pltpu.CompilerParams(
            dimension_semantics=("parallel", "arbitrary"),
            vmem_limit_bytes=32 * 1024 * 1024),
    )(x_r, w, b)

    out = out.reshape(B, C2p)
    if C2p != C2:
        out = out[:, :C2]
    return out


# ---------------------------------------------------------------------------
# Pure-JAX reference (same math) for a sanity check
# ---------------------------------------------------------------------------
def classify_ref(x, weight, bias):
    z = jnp.mean(x.astype(jnp.float32), axis=(2, 3))               # (B, C1)
    return jnp.dot(z, weight.astype(jnp.float32)) + bias.astype(jnp.float32)


if __name__ == "__main__":
    key = jax.random.PRNGKey(0)
    kx, kw, kb = jax.random.split(key, 3)

    B, C1, C2, H, W = 2, 4, 8, 16, 16
    x = jax.random.normal(kx, (B, C1, H, W), jnp.float32)

    # torch Conv2d(c1, c2, 1) weight layout: (C2, C1, 1, 1)
    w_torch = 0.1 * jax.random.normal(kw, (C2, C1, 1, 1), jnp.float32)
    bias = 0.1 * jax.random.normal(kb, (C2,), jnp.float32)
    weight = jnp.transpose(w_torch[:, :, 0, 0], (1, 0))            # (C1, C2)

    out = classify_forward(x, weight, bias)
    out = jax.block_until_ready(out)
    assert out.shape == (B, C2)

    ref = classify_ref(x, weight, bias)
    assert jnp.allclose(out.astype(jnp.float32), ref, atol=1e-4, rtol=1e-4), \
        "mismatch vs reference"

    print("KERNEL_OK")
</pallas_src>

<mosaic_0001>
module attributes {stable_mosaic.version = 11 : i64} {
  func.func @classify_kernel(%arg0: i32, %arg1: i32, %arg2: memref<2x4x256xf32, #tpu.memory_space<vmem>>, %arg3: memref<4x128xf32, #tpu.memory_space<vmem>>, %arg4: memref<1x128xf32, #tpu.memory_space<vmem>>, %arg5: memref<2x1x128xf32, #tpu.memory_space<vmem>>, %arg6: memref<2x4x128xf32, #tpu.memory_space<vmem>>) attributes {dimension_semantics = [#tpu.dimension_semantics<parallel>, #tpu.dimension_semantics<arbitrary>], iteration_bounds = array<i64: 1, 1>, scalar_prefetch = 0 : i64, scratch_operands = 1 : i64, tpu.core_type = #tpu.core_type<tc>, window_params = [{transform_indices = @transform_0, window_bounds = array<i64: 2, 4, 256>}, {pipeline_mode = #tpu.pipeline_mode<synchronous>, transform_indices = @transform_1, window_bounds = array<i64: 4, 128>}, {pipeline_mode = #tpu.pipeline_mode<synchronous>, transform_indices = @transform_2, window_bounds = array<i64: 1, 128>}, {transform_indices = @transform_3, window_bounds = array<i64: 2, 1, 128>}]} {
    %c0_i32 = arith.constant 0 : i32
    %0 = arith.cmpi eq, %arg1, %c0_i32 : i32
    %1 = arith.extui %0 : i1 to i32
    %c0_i32_0 = arith.constant 0 : i32
    %2 = arith.cmpi ne, %1, %c0_i32_0 : i32
    scf.if %2 {
      %cst = arith.constant 0.000000e+00 : f32
      %14 = vector.broadcast %cst : f32 to vector<2x4x128xf32>
      %c0_19 = arith.constant 0 : index
      %c0_20 = arith.constant 0 : index
      %c0_21 = arith.constant 0 : index
      %15 = vector.load %arg6[%c0_19, %c0_20, %c0_21] : memref<2x4x128xf32, #tpu.memory_space<vmem>>, vector<2x4x128xf32>
      tpu.vector_store %arg6[%c0_19, %c0_20, %c0_21], %14 {strides = array<i32>} : memref<2x4x128xf32, #tpu.memory_space<vmem>>, vector<2x4x128xf32>,
    } else {
    }
    %c0 = arith.constant 0 : index
    %c0_1 = arith.constant 0 : index
    %c0_2 = arith.constant 0 : index
    %3 = vector.load %arg2[%c0, %c0_1, %c0_2] : memref<2x4x256xf32, #tpu.memory_space<vmem>>, vector<2x4x128xf32>
    %c0_3 = arith.constant 0 : index
    %c0_4 = arith.constant 0 : index
    %c0_5 = arith.constant 0 : index
    %4 = vector.load %arg6[%c0_3, %c0_4, %c0_5] : memref<2x4x128xf32, #tpu.memory_space<vmem>>, vector<2x4x128xf32>
    %5 = arith.addf %4, %3 : vector<2x4x128xf32>
    %c0_6 = arith.constant 0 : index
    %c0_7 = arith.constant 0 : index
    %c0_8 = arith.constant 0 : index
    %6 = vector.load %arg6[%c0_6, %c0_7, %c0_8] : memref<2x4x128xf32, #tpu.memory_space<vmem>>, vector<2x4x128xf32>
    tpu.vector_store %arg6[%c0_6, %c0_7, %c0_8], %5 {strides = array<i32>} : memref<2x4x128xf32, #tpu.memory_space<vmem>>, vector<2x4x128xf32>,
    %c0_9 = arith.constant 0 : index
    %c0_10 = arith.constant 0 : index
    %c128 = arith.constant 128 : index
    %7 = vector.load %arg2[%c0_9, %c0_10, %c128] : memref<2x4x256xf32, #tpu.memory_space<vmem>>, vector<2x4x128xf32>
    %c0_11 = arith.constant 0 : index
    %c0_12 = arith.constant 0 : index
    %c0_13 = arith.constant 0 : index
    %8 = vector.load %arg6[%c0_11, %c0_12, %c0_13] : memref<2x4x128xf32, #tpu.memory_space<vmem>>, vector<2x4x128xf32>
    %9 = arith.addf %8, %7 : vector<2x4x128xf32>
    %c0_14 = arith.constant 0 : index
    %c0_15 = arith.constant 0 : index
    %c0_16 = arith.constant 0 : index
    %10 = vector.load %arg6[%c0_14, %c0_15, %c0_16] : memref<2x4x128xf32, #tpu.memory_space<vmem>>, vector<2x4x128xf32>
    tpu.vector_store %arg6[%c0_14, %c0_15, %c0_16], %9 {strides = array<i32>} : memref<2x4x128xf32, #tpu.memory_space<vmem>>, vector<2x4x128xf32>,
    %c0_i32_17 = arith.constant 0 : i32
    %11 = arith.cmpi eq, %arg1, %c0_i32_17 : i32
    %12 = arith.extui %11 : i1 to i32
    %c0_i32_18 = arith.constant 0 : i32
    %13 = arith.cmpi ne, %12, %c0_i32_18 : i32
    scf.if %13 {
      %c0_19 = arith.constant 0 : index
      %c0_20 = arith.constant 0 : index
      %c0_21 = arith.constant 0 : index
      %14 = vector.load %arg6[%c0_19, %c0_20, %c0_21] : memref<2x4x128xf32, #tpu.memory_space<vmem>>, vector<2x4x128xf32>
      %cst = arith.constant dense<0.000000e+00> : vector<2x4xf32>
      %15 = vector.multi_reduction <add>, %14, %cst [2] : vector<2x4x128xf32> to vector<2x4xf32>
      %cst_22 = arith.constant 3.906250e-03 : f32
      %16 = vector.broadcast %cst_22 : f32 to vector<2x4xf32>
      %17 = arith.mulf %15, %16 : vector<2x4xf32>
      %c0_23 = arith.constant 0 : index
      %c0_24 = arith.constant 0 : index
      %18 = vector.load %arg3[%c0_23, %c0_24] : memref<4x128xf32, #tpu.memory_space<vmem>>, vector<4x128xf32>
      %cst_25 = arith.constant dense<0.000000e+00> : vector<2x128xf32>
      %19 = tpu.matmul %17, %18, %cst_25 {dimension_numbers = #tpu.dot_dimension_numbers<[1], [0], [0], [1], [0, 0, 1, 1], [], []>} : vector<2x4xf32>, vector<4x128xf32>, vector<2x128xf32> -> vector<2x128xf32>
      %c0_26 = arith.constant 0 : index
      %c0_27 = arith.constant 0 : index
      %20 = vector.load %arg4[%c0_26, %c0_27] : memref<1x128xf32, #tpu.memory_space<vmem>>, vector<1x128xf32>
      %21 = vector.broadcast %20 : vector<1x128xf32> to vector<2x128xf32>
      %22 = arith.addf %19, %21 : vector<2x128xf32>
      %23 = vector.shape_cast %22 : vector<2x128xf32> to vector<2x1x128xf32>
      %c0_28 = arith.constant 0 : index
      %c0_29 = arith.constant 0 : index
      %c0_30 = arith.constant 0 : index
      %24 = vector.load %arg5[%c0_28, %c0_29, %c0_30] : memref<2x1x128xf32, #tpu.memory_space<vmem>>, vector<2x1x128xf32>
      tpu.vector_store %arg5[%c0_28, %c0_29, %c0_30], %23 {strides = array<i32>} : memref<2x1x128xf32, #tpu.memory_space<vmem>>, vector<2x1x128xf32>,
    } else {
    }
    return
  }
  func.func @transform_0(%arg0: i32, %arg1: i32) -> (i32, i32, i32) {
    %c0_i32 = arith.constant 0 : i32
    %c0_i32_0 = arith.constant 0 : i32
    return %arg0, %c0_i32, %arg1 : i32, i32, i32
  }
  func.func @transform_1(%arg0: i32, %arg1: i32) -> (i32, i32) {
    %c0_i32 = arith.constant 0 : i32
    %c0_i32_0 = arith.constant 0 : i32
    %c0_i32_1 = arith.constant 0 : i32
    return %c0_i32, %c0_i32_0 : i32, i32
  }
  func.func @transform_2(%arg0: i32, %arg1: i32) -> (i32, i32) {
    %c0_i32 = arith.constant 0 : i32
    %c0_i32_0 = arith.constant 0 : i32
    %c0_i32_1 = arith.constant 0 : i32
    return %c0_i32, %c0_i32_0 : i32, i32
  }
  func.func @transform_3(%arg0: i32, %arg1: i32) -> (i32, i32, i32) {
    %c0_i32 = arith.constant 0 : i32
    %c0_i32_0 = arith.constant 0 : i32
    %c0_i32_1 = arith.constant 0 : i32
    return %arg0, %c0_i32, %c0_i32_0 : i32, i32, i32
  }
}

</mosaic_0001>

<llo_original>
// kernel: tpu_custom_call.1
$region0: #{tpu_custom_call.1}
  #allocation0 [shape = 'u32[]', space=smem, size = 0x4, offset = 0x4, fixed_abs, tag = 'smem constant byte address 0x4 - core index']
  #allocation1 [shape = 'u32[72,128]{1,0:T(1,128)}', space=vmem, size = 0x9000, scoped, tag = 'internal scratch']
  #allocation2 [shape = 'f32[2,4,128]{2,1,0:T(4,128)}', space=vmem, size = 0x1000, scoped, tag = 'scratch operand']
  %s0 = inlined_call_operand.hbm [shape: f32[2,4,256], index: 0, kind: input, shape index: {}]
  %s1 = inlined_call_operand.hbm [shape: f32[4,128], index: 1, kind: input, shape index: {}]
  %s2 = inlined_call_operand.vmem [shape: f32[1,128], index: 2, kind: input, shape index: {}]
  %s3 = inlined_call_operand.hbm [shape: f32[2,1,128], index: 3, kind: output, shape index: {}]
  %s4 = sld [smem:[#allocation0]]
  $region38: #{tpu_custom_call.1} parent=0
    _
  %s6 = ssub.s32 1, %s4
  %s7 = scalar_select 0, %s6, %s4
  $region1: #{tpu_custom_call.1} parent=0
    #allocation3 [shape = 'u8[8192]{0}', space=vmem, size = 0x2000, scoped, tag = 'input window, operand 0, single buffered']
    #allocation4 [shape = 's32[1]{0}', space=sflag, size = 0x4, scoped, tag = 'scoped memory for tpu_custom_call.1']
    #allocation5 [shape = 's32[1]{0}', space=sflag, size = 0x4, scoped, tag = 'scoped memory for tpu_custom_call.1']
    #allocation6 [shape = 'u8[2048]{0}', space=vmem, size = 0x800, scoped, tag = 'input window, operand 1, single buffered']
    #allocation7 [shape = 's32[1]{0}', space=sflag, size = 0x4, scoped, tag = 'scoped memory for tpu_custom_call.1']
    #allocation8 [shape = 'u8[1024]{0}', space=vmem, size = 0x400, scoped, tag = 'output window, operand 0, single buffered']
    %8 = vsyncpa [#allocation4], 0
    %9 = vsyncpa [#allocation7], 0
    %10 = vsyncpa [#allocation5], 0
    // Predicated region
    $region2: #{tpu_custom_call.1} parent=1 // pred_check
      _
    $region3: #{tpu_custom_call.1} parent=1 // pred_check_branch
      %12 = sbr.rel (0) target = $region5
    $region4: #{tpu_custom_call.1} parent=1 // pred_region
      %14 = vsyncadd [#allocation4], 0
      %s15 = sshll.u32 %s0, 4
      %s16 = int_to_ptr.hbm [resolvable:$true] %s15
      %s17 = sshll.u32 [#allocation3], 4
      %s18 = int_to_ptr.vmem [resolvable:$true] %s17
      %23 = dma.hbm_to_vmem [thread:$0]  %s16, 256, %s18, [#allocation4], 128, 128, 8
    $region5: #{tpu_custom_call.1} parent=1 // pred_fallthru
      _
    // Predicated region
    $region6: #{tpu_custom_call.1} parent=1 // pred_check
      _
    $region7: #{tpu_custom_call.1} parent=1 // pred_check_branch
      %25 = sbr.rel (0) target = $region9
    $region8: #{tpu_custom_call.1} parent=1 // pred_region
      %27 = vsyncadd [#allocation7], 0
      %s29 = sshll.u32 %s1, 4
      %s30 = int_to_ptr.hbm [resolvable:$true] %s29
      %s31 = sshll.u32 [#allocation6], 4
      %s32 = int_to_ptr.vmem [resolvable:$true] %s31
      %34 = dma.hbm_to_vmem [thread:$0]  %s30, 64, %s32, [#allocation7]
    $region9: #{tpu_custom_call.1} parent=1 // pred_fallthru
      _
    // Predicated region
    $region10: #{tpu_custom_call.1} parent=1 // pred_check
      _
    $region11: #{tpu_custom_call.1} parent=1 // pred_check_branch
      %36 = sbr.rel (0) target = $region13
    $region12: #{tpu_custom_call.1} parent=1 // pred_region
      _
    $region13: #{tpu_custom_call.1} parent=1 // pred_fallthru
      _
    // Predicated region
    $region14: #{tpu_custom_call.1} parent=1 // pred_check
      _
    $region15: #{tpu_custom_call.1} parent=1 // pred_check_branch
      %38 = sbr.rel (0) target = $region17
    $region16: #{tpu_custom_call.1} parent=1 // pred_region
      %40 = dma.done [#allocation4], 256
    $region17: #{tpu_custom_call.1} parent=1 // pred_fallthru
      _
    // Predicated region
    $region18: #{tpu_custom_call.1} parent=1 // pred_check
      _
    $region19: #{tpu_custom_call.1} parent=1 // pred_check_branch
      %42 = sbr.rel (0) target = $region21
    $region20: #{tpu_custom_call.1} parent=1 // pred_region
      %44 = dma.done [#allocation7], 64
    $region21: #{tpu_custom_call.1} parent=1 // pred_fallthru
      _
    %p45 = scmp.eq.s32.totalorder 0, 0
    // Predicated region
    $region22: #{tpu_custom_call.1} parent=1 // pred_check
      %p46 = pneg %p45
    $region23: #{tpu_custom_call.1} parent=1 // pred_check_branch
      %48 = sbr.rel (%p46) target = $region25
    $region24: #{tpu_custom_call.1} parent=1 // pred_region
      %49 = vst [vmem:[#allocation2] sm:$0xf] 0.0
      %50 = vst [vmem:[#allocation2 + $0x4] sm:$0xf] 0.0
    $region25: #{tpu_custom_call.1} parent=1 // pred_fallthru
      _
    %v51 = vld [vmem:[#allocation3] sm:$0xf]
    %v52 = vld [vmem:[#allocation3 + $0x8] sm:$0xf]
    %v53 = vld [vmem:[#allocation2] sm:$0xf]
    %v54 = vld [vmem:[#allocation2 + $0x4] sm:$0xf]
    %v55 = vadd.f32 %v53, %v51
    %v56 = vadd.f32 %v54, %v52
    %57 = vst [vmem:[#allocation2] sm:$0xf] %v55
    %58 = vst [vmem:[#allocation2 + $0x4] sm:$0xf] %v56
    %v59 = vld [vmem:[#allocation3 + $0x4] sm:$0xf]
    %v60 = vld [vmem:[#allocation3 + $0xc] sm:$0xf]
    %v61 = vld [vmem:[#allocation2] sm:$0xf]
    %v62 = vld [vmem:[#allocation2 + $0x4] sm:$0xf]
    %v63 = vadd.f32 %v61, %v59
    %v64 = vadd.f32 %v62, %v60
    %65 = vst [vmem:[#allocation2] sm:$0xf] %v63
    %66 = vst [vmem:[#allocation2 + $0x4] sm:$0xf] %v64
    // Predicated region
    $region26: #{tpu_custom_call.1} parent=1 // pred_check
      %p67 = pneg %p45
    $region27: #{tpu_custom_call.1} parent=1 // pred_check_branch
      %69 = sbr.rel (%p67) target = $region29
    $region28: #{tpu_custom_call.1} parent=1 // pred_region
      %v70 = vld [vmem:[#allocation2] sm:$0xf]
      %v71 = vld [vmem:[#allocation2 + $0x4] sm:$0xf]
      %vm72 = vcmask 1043456
      %v73 = vsel %vm72, %v70, 0.0
      %74 = vadd.xlane.f32.xlu0 %v73
      %v75 = vpop.xlane.xlu0 %74
      %v76 = vsel %vm72, %v71, 0.0
      %77 = vadd.xlane.f32.xlu0 %v76
      %v78 = vpop.xlane.xlu0 %77
      %v79 = vmul.f32 %v75, 0.00390625
      %v80 = vmul.f32 %v78, 0.00390625
      %v81 = vld [vmem:[#allocation6] sm:$0xf]
      %v82 = vld [vmem:[%s2] sm:$0x1]
      %v84 = vperm.slane %v82, 0
      %v88 = vlaneseq
      %v89 = vand.u32 %v88, 127
      %v90 = vperm.slane %v79, %v89
      %v91 = vperm.slane %v80, %v89
      %vm92 = vcmask 1041409
      %v93 = vsel %vm92, %v91, %v90
      %vm94 = vcmask 31744
      %v95 = vsel %vm94, %v93, 0
      %v98 = vsel %vm72, %v81, 0
      %100 = vmatpush.msra.mxu0 0.0
      %101 = vmatpush.msra.mxu0 0.0
      %102 = vmatpush.msra.mxu0 0.0
      %103 = vmatpush.msra.mxu0 0.0
      %104 = vmatpush.msra.mxu0 0.0
      %105 = vmatpush.msra.mxu0 0.0
      %106 = vmatpush.msra.mxu0 0.0
      %107 = vmatpush.msra.mxu0 0.0
      %108 = vmatpush.msra.mxu0 0.0
      %109 = vmatpush.msra.mxu0 0.0
      %110 = vmatpush.msra.mxu0 0.0
      %111 = vmatpush.msra.mxu0 0.0
      %112 = vmatpush.msra.mxu0 0.0
      %113 = vmatpush.msra.mxu0 0.0
      %114 = vmatpush.msra.mxu0 0.0
      %115 = vmatpush.msra.mxu0 %v98
      %116 = vmatmul.f32.gmra.mxu0 %v95
      %v117 = vpop.f32.mrf.mxu0
      %v118 = vadd.f32 %v84, %v117
      %119 = vdwg.mxu0
      %v121 = vrot.slane %v118, 1
      %123 = vst [vmem:[#allocation8] sm:$0x1] %v118
      %124 = vst [vmem:[#allocation8 + $0x1] sm:$0x1] %v121
    $region29: #{tpu_custom_call.1} parent=1 // pred_fallthru
      _
    // Predicated region
    $region30: #{tpu_custom_call.1} parent=1 // pred_check
      _
    $region31: #{tpu_custom_call.1} parent=1 // pred_check_branch
      %126 = sbr.rel (0) target = $region33
    $region32: #{tpu_custom_call.1} parent=1 // pred_region
      %128 = vsyncadd [#allocation5], 0
      %s129 = sshll.u32 [#allocation8], 4
      %s130 = int_to_ptr.vmem [resolvable:$true] %s129
      %s131 = sshll.u32 %s3, 4
      %s132 = int_to_ptr.hbm [resolvable:$true] %s131
      %137 = dma.vmem_to_hbm [thread:$0]  %s130, 32, %s132, [#allocation5], 16, 16, 1
    $region33: #{tpu_custom_call.1} parent=1 // pred_fallthru
      _
    // Predicated region
    $region34: #{tpu_custom_call.1} parent=1 // pred_check
      _
    $region35: #{tpu_custom_call.1} parent=1 // pred_check_branch
      %139 = sbr.rel (0) target = $region37
    $region36: #{tpu_custom_call.1} parent=1 // pred_region
      %141 = dma.done [#allocation5], 32
    $region37: #{tpu_custom_call.1} parent=1 // pred_fallthru
      _
    %142 = vsyncpa [#allocation4], 1
    %143 = vsyncpa [#allocation7], 1
    %144 = vsyncpa [#allocation5], 1

</llo_original>
